<compile_context>
chip_gen: v7x
topology: tpu7x:2x2x1
jax: 0.10.0
libtpu: 0.0.40
codegen_flags: <defaults>
</compile_context>

<pallas_src>
import functools

import jax
import jax.numpy as jnp
from jax.experimental import pallas as pl
from jax.experimental.pallas import tpu as pltpu


def _readout_kernel(h_ref, o_ref, acc_ref, *, inv_n):
    """One grid step: accumulate node-sums for TB batch rows; finalize on last k."""
    k = pl.program_id(1)

    @pl.when(k == 0)
    def _():
        acc_ref[...] = jnp.zeros_like(acc_ref)

    # f32-accumulated partial sum over this node tile: (TB, TN, H) -> (TB, H).
    acc_ref[...] += jnp.sum(h_ref[...], axis=1, dtype=jnp.float32)

    @pl.when(k == pl.num_programs(1) - 1)
    def _():
        mean = acc_ref[...] * inv_n                 # mean over all N nodes
        o_ref[...] = jax.nn.sigmoid(mean).astype(o_ref.dtype)


def _choose_tiles(B, N, H, itemsize, budget_bytes=8 * 1024 * 1024):
    """Pick (TB, TN) tiles: TB fills sublanes, double-buffered block fits VMEM."""
    # TB: prefer a multiple of 8 that divides B; else largest small divisor.
    tb = next((c for c in (64, 32, 16, 8, 4, 2, 1) if B % c == 0), 1)
    # TN: largest node tile (multiple of 8, or N itself == full dim) whose
    # double-buffered (TB, TN, H) input block stays inside the VMEM budget.
    cands = sorted(
        {N} | {c for c in (2048, 1024, 512, 256, 128, 64, 32, 16, 8) if N % c == 0},
        reverse=True,
    )
    for tn in cands:
        if 2 * tb * tn * H * itemsize <= budget_bytes:
            return tb, tn
    return tb, cands[-1]  # smallest legal tile (huge H); still correct


def readout(h, *, tb=None, tn=None):
    B, N, H = h.shape
    auto_tb, auto_tn = _choose_tiles(B, N, H, h.dtype.itemsize)
    tb = auto_tb if tb is None else tb
    tn = auto_tn if tn is None else tn
    assert B % tb == 0 and N % tn == 0, (B, N, tb, tn)

    kernel = functools.partial(_readout_kernel, inv_n=1.0 / float(N))

    return pl.pallas_call(
        kernel,
        out_shape=jax.ShapeDtypeStruct((B, H), h.dtype),
        grid=(B // tb, N // tn),
        in_specs=[pl.BlockSpec((tb, tn, H), lambda b, k: (b, k, 0))],
        out_specs=pl.BlockSpec((tb, H), lambda b, k: (b, 0)),
        scratch_shapes=[pltpu.VMEM((tb, H), jnp.float32)],
        compiler_params=pltpu.CompilerParams(
            dimension_semantics=("parallel", "arbitrary")
        ),
    )(h)


if __name__ == "__main__":
    key0, key1 = jax.random.split(jax.random.PRNGKey(0))

    # Small demo: batch=8 (fills the 8 sublanes of a tile), nodes=16, hidden=32.
    B, N, H = 8, 16, 32
    h = jax.random.normal(key0, (B, N, H), dtype=jnp.float32)

    out = jax.block_until_ready(readout(h))
    ref = jax.nn.sigmoid(jnp.mean(h, axis=1))
    assert out.shape == (B, H)
    assert jnp.allclose(out, ref, atol=1e-5, rtol=1e-5)

    # Also exercise the N-tiled accumulation path (multiple reduction steps).
    h2 = jax.random.normal(key1, (B, 64, H), dtype=jnp.float32)
    out2 = jax.block_until_ready(readout(h2, tb=8, tn=16))
    ref2 = jax.nn.sigmoid(jnp.mean(h2, axis=1))
    assert jnp.allclose(out2, ref2, atol=1e-5, rtol=1e-5)

    print("KERNEL_OK")
</pallas_src>

<mosaic_0001>
module attributes {stable_mosaic.version = 11 : i64} {
  func.func @_readout_kernel(%arg0: i32, %arg1: i32, %arg2: memref<8x16x32xf32, #tpu.memory_space<vmem>>, %arg3: memref<8x32xf32, #tpu.memory_space<vmem>>, %arg4: memref<8x32xf32, #tpu.memory_space<vmem>>) attributes {dimension_semantics = [#tpu.dimension_semantics<parallel>, #tpu.dimension_semantics<arbitrary>], iteration_bounds = array<i64: 1, 1>, scalar_prefetch = 0 : i64, scratch_operands = 1 : i64, tpu.core_type = #tpu.core_type<tc>, window_params = [{transform_indices = @transform_0, window_bounds = array<i64: 8, 16, 32>}, {transform_indices = @transform_1, window_bounds = array<i64: 8, 32>}]} {
    %c0_i32 = arith.constant 0 : i32
    %0 = arith.cmpi eq, %arg1, %c0_i32 : i32
    %1 = arith.extui %0 : i1 to i32
    %c0_i32_0 = arith.constant 0 : i32
    %2 = arith.cmpi ne, %1, %c0_i32_0 : i32
    scf.if %2 {
      %cst_9 = arith.constant 0.000000e+00 : f32
      %11 = vector.broadcast %cst_9 : f32 to vector<8x32xf32>
      %c0_10 = arith.constant 0 : index
      %c0_11 = arith.constant 0 : index
      %12 = vector.load %arg4[%c0_10, %c0_11] : memref<8x32xf32, #tpu.memory_space<vmem>>, vector<8x32xf32>
      tpu.vector_store %arg4[%c0_10, %c0_11], %11 {strides = array<i32>} : memref<8x32xf32, #tpu.memory_space<vmem>>, vector<8x32xf32>,
    } else {
    }
    %c0 = arith.constant 0 : index
    %c0_1 = arith.constant 0 : index
    %3 = vector.load %arg4[%c0, %c0_1] : memref<8x32xf32, #tpu.memory_space<vmem>>, vector<8x32xf32>
    %c0_2 = arith.constant 0 : index
    %c0_3 = arith.constant 0 : index
    %c0_4 = arith.constant 0 : index
    %4 = vector.load %arg2[%c0_2, %c0_3, %c0_4] : memref<8x16x32xf32, #tpu.memory_space<vmem>>, vector<8x16x32xf32>
    %cst = arith.constant dense<0.000000e+00> : vector<8x32xf32>
    %5 = vector.multi_reduction <add>, %4, %cst [1] : vector<8x16x32xf32> to vector<8x32xf32>
    %6 = arith.addf %3, %5 : vector<8x32xf32>
    %c0_5 = arith.constant 0 : index
    %c0_6 = arith.constant 0 : index
    %7 = vector.load %arg4[%c0_5, %c0_6] : memref<8x32xf32, #tpu.memory_space<vmem>>, vector<8x32xf32>
    tpu.vector_store %arg4[%c0_5, %c0_6], %6 {strides = array<i32>} : memref<8x32xf32, #tpu.memory_space<vmem>>, vector<8x32xf32>,
    %c0_i32_7 = arith.constant 0 : i32
    %8 = arith.cmpi eq, %arg1, %c0_i32_7 : i32
    %9 = arith.extui %8 : i1 to i32
    %c0_i32_8 = arith.constant 0 : i32
    %10 = arith.cmpi ne, %9, %c0_i32_8 : i32
    scf.if %10 {
      %c0_9 = arith.constant 0 : index
      %c0_10 = arith.constant 0 : index
      %11 = vector.load %arg4[%c0_9, %c0_10] : memref<8x32xf32, #tpu.memory_space<vmem>>, vector<8x32xf32>
      %cst_11 = arith.constant 6.250000e-02 : f32
      %12 = vector.broadcast %cst_11 : f32 to vector<8x32xf32>
      %13 = arith.mulf %11, %12 : vector<8x32xf32>
      %14 = arith.negf %13 : vector<8x32xf32>
      %15 = math.exp %14 : vector<8x32xf32>
      %cst_12 = arith.constant 1.000000e+00 : f32
      %16 = vector.broadcast %cst_12 : f32 to vector<8x32xf32>
      %17 = arith.addf %16, %15 : vector<8x32xf32>
      %18 = arith.divf %16, %17 : vector<8x32xf32>
      %c0_13 = arith.constant 0 : index
      %c0_14 = arith.constant 0 : index
      %19 = vector.load %arg3[%c0_13, %c0_14] : memref<8x32xf32, #tpu.memory_space<vmem>>, vector<8x32xf32>
      tpu.vector_store %arg3[%c0_13, %c0_14], %18 {strides = array<i32>} : memref<8x32xf32, #tpu.memory_space<vmem>>, vector<8x32xf32>,
    } else {
    }
    return
  }
  func.func @transform_0(%arg0: i32, %arg1: i32) -> (i32, i32, i32) {
    %c0_i32 = arith.constant 0 : i32
    %c0_i32_0 = arith.constant 0 : i32
    return %arg0, %arg1, %c0_i32 : i32, i32, i32
  }
  func.func @transform_1(%arg0: i32, %arg1: i32) -> (i32, i32) {
    %c0_i32 = arith.constant 0 : i32
    %c0_i32_0 = arith.constant 0 : i32
    return %arg0, %c0_i32 : i32, i32
  }
}

</mosaic_0001>

<llo_original>
// kernel: tpu_custom_call.1
$region0: #{tpu_custom_call.1}
  #allocation0 [shape = 'u32[]', space=smem, size = 0x4, offset = 0x4, fixed_abs, tag = 'smem constant byte address 0x4 - core index']
  #allocation1 [shape = 'u32[144,128]{1,0:T(1,128)}', space=vmem, size = 0x12000, scoped, tag = 'internal scratch']
  #allocation2 [shape = 'f32[8,32]{1,0:T(8,128)}', space=vmem, size = 0x1000, scoped, tag = 'scratch operand']
  %s0 = inlined_call_operand.hbm [shape: f32[8,16,32], index: 0, kind: input, shape index: {}]
  %s1 = inlined_call_operand.hbm [shape: f32[8,32], index: 1, kind: output, shape index: {}]
  %s2 = sld [smem:[#allocation0]]
  $region26: #{tpu_custom_call.1} parent=0
    _
  %s4 = ssub.s32 1, %s2
  %s5 = scalar_select 0, %s4, %s2
  $region1: #{tpu_custom_call.1} parent=0
    #allocation3 [shape = 'u8[65536]{0}', space=vmem, size = 0x10000, scoped, tag = 'input window, operand 0, single buffered']
    #allocation4 [shape = 's32[1]{0}', space=sflag, size = 0x4, scoped, tag = 'scoped memory for tpu_custom_call.1']
    #allocation5 [shape = 's32[1]{0}', space=sflag, size = 0x4, scoped, tag = 'scoped memory for tpu_custom_call.1']
    #allocation6 [shape = 'u8[4096]{0}', space=vmem, size = 0x1000, scoped, tag = 'output window, operand 0, single buffered']
    %6 = vsyncpa [#allocation4], 0
    %7 = vsyncpa [#allocation5], 0
    // Predicated region
    $region2: #{tpu_custom_call.1} parent=1 // pred_check
      _
    $region3: #{tpu_custom_call.1} parent=1 // pred_check_branch
      %9 = sbr.rel (0) target = $region5
    $region4: #{tpu_custom_call.1} parent=1 // pred_region
      %s11 = ssub.s32 2048, 2048
      %12 = vsyncadd [#allocation4], %s11
      %s13 = sshll.u32 [#allocation3], 4
      %s14 = int_to_ptr.vmem [resolvable:$true] %s13
      %19 = dma.hbm_to_vmem [thread:$0]  %s0, 2048, %s14, [#allocation4], 128, 128, 8
    $region5: #{tpu_custom_call.1} parent=1 // pred_fallthru
      _
    // Predicated region
    $region6: #{tpu_custom_call.1} parent=1 // pred_check
      _
    $region7: #{tpu_custom_call.1} parent=1 // pred_check_branch
      %21 = sbr.rel (0) target = $region9
    $region8: #{tpu_custom_call.1} parent=1 // pred_region
      %22 = dma.done [#allocation4], 2048
    $region9: #{tpu_custom_call.1} parent=1 // pred_fallthru
      _
    %p23 = scmp.eq.s32.totalorder 0, 0
    // Predicated region
    $region10: #{tpu_custom_call.1} parent=1 // pred_check
      %p24 = pneg %p23
    $region11: #{tpu_custom_call.1} parent=1 // pred_check_branch
      %26 = sbr.rel (%p24) target = $region13
    $region12: #{tpu_custom_call.1} parent=1 // pred_region
      %vm27 = vcmask 261120
      %28 = vst.msk [vmem:[#allocation2] sm:$0xff] %vm27, 0.0
    $region13: #{tpu_custom_call.1} parent=1 // pred_fallthru
      _
    %v29 = vld [vmem:[#allocation2] sm:$0xff]
    %v30 = vld [vmem:[#allocation3] sm:$0xff]
    %v31 = vld [vmem:[#allocation3 + $0x8] sm:$0xff]
    %v32 = vld [vmem:[#allocation3 + $0x10] sm:$0xff]
    %v33 = vld [vmem:[#allocation3 + $0x18] sm:$0xff]
    %v34 = vld [vmem:[#allocation3 + $0x20] sm:$0xff]
    %v35 = vld [vmem:[#allocation3 + $0x28] sm:$0xff]
    %v36 = vld [vmem:[#allocation3 + $0x30] sm:$0xff]
    %v37 = vld [vmem:[#allocation3 + $0x38] sm:$0xff]
    %v38 = vld [vmem:[#allocation3 + $0x40] sm:$0xff]
    %v39 = vld [vmem:[#allocation3 + $0x48] sm:$0xff]
    %v40 = vld [vmem:[#allocation3 + $0x50] sm:$0xff]
    %v41 = vld [vmem:[#allocation3 + $0x58] sm:$0xff]
    %v42 = vld [vmem:[#allocation3 + $0x60] sm:$0xff]
    %v43 = vld [vmem:[#allocation3 + $0x68] sm:$0xff]
    %v44 = vld [vmem:[#allocation3 + $0x70] sm:$0xff]
    %v45 = vld [vmem:[#allocation3 + $0x78] sm:$0xff]
    %vm46 = vcmask 261120
    %v47 = vsel %vm46, %v30, 0.0
    %v48 = vsel %vm46, %v31, 0.0
    %v49 = vadd.f32 %v47, %v48
    %v50 = vrot.slane %v49, 4
    %v51 = vadd.f32 %v49, %v50
    %v52 = vrot.slane %v51, 2
    %v53 = vadd.f32 %v51, %v52
    %v54 = vrot.slane %v53, 1
    %v55 = vadd.f32 %v53, %v54
    %v56 = vsel %vm46, %v32, 0.0
    %v57 = vsel %vm46, %v33, 0.0
    %v58 = vadd.f32 %v56, %v57
    %v59 = vrot.slane %v58, 4
    %v60 = vadd.f32 %v58, %v59
    %v61 = vrot.slane %v60, 2
    %v62 = vadd.f32 %v60, %v61
    %v63 = vrot.slane %v62, 1
    %v64 = vadd.f32 %v62, %v63
    %v65 = vsel %vm46, %v34, 0.0
    %v66 = vsel %vm46, %v35, 0.0
    %v67 = vadd.f32 %v65, %v66
    %v68 = vrot.slane %v67, 4
    %v69 = vadd.f32 %v67, %v68
    %v70 = vrot.slane %v69, 2
    %v71 = vadd.f32 %v69, %v70
    %v72 = vrot.slane %v71, 1
    %v73 = vadd.f32 %v71, %v72
    %v74 = vsel %vm46, %v36, 0.0
    %v75 = vsel %vm46, %v37, 0.0
    %v76 = vadd.f32 %v74, %v75
    %v77 = vrot.slane %v76, 4
    %v78 = vadd.f32 %v76, %v77
    %v79 = vrot.slane %v78, 2
    %v80 = vadd.f32 %v78, %v79
    %v81 = vrot.slane %v80, 1
    %v82 = vadd.f32 %v80, %v81
    %v83 = vsel %vm46, %v38, 0.0
    %v84 = vsel %vm46, %v39, 0.0
    %v85 = vadd.f32 %v83, %v84
    %v86 = vrot.slane %v85, 4
    %v87 = vadd.f32 %v85, %v86
    %v88 = vrot.slane %v87, 2
    %v89 = vadd.f32 %v87, %v88
    %v90 = vrot.slane %v89, 1
    %v91 = vadd.f32 %v89, %v90
    %v92 = vsel %vm46, %v40, 0.0
    %v93 = vsel %vm46, %v41, 0.0
    %v94 = vadd.f32 %v92, %v93
    %v95 = vrot.slane %v94, 4
    %v96 = vadd.f32 %v94, %v95
    %v97 = vrot.slane %v96, 2
    %v98 = vadd.f32 %v96, %v97
    %v99 = vrot.slane %v98, 1
    %v100 = vadd.f32 %v98, %v99
    %v101 = vsel %vm46, %v42, 0.0
    %v102 = vsel %vm46, %v43, 0.0
    %v103 = vadd.f32 %v101, %v102
    %v104 = vrot.slane %v103, 4
    %v105 = vadd.f32 %v103, %v104
    %v106 = vrot.slane %v105, 2
    %v107 = vadd.f32 %v105, %v106
    %v108 = vrot.slane %v107, 1
    %v109 = vadd.f32 %v107, %v108
    %v110 = vsel %vm46, %v44, 0.0
    %v111 = vsel %vm46, %v45, 0.0
    %v112 = vadd.f32 %v110, %v111
    %v113 = vrot.slane %v112, 4
    %v114 = vadd.f32 %v112, %v113
    %v115 = vrot.slane %v114, 2
    %v116 = vadd.f32 %v114, %v115
    %v117 = vrot.slane %v116, 1
    %v118 = vadd.f32 %v116, %v117
    %vm127 = vcmask 1041409
    %v128 = vsel %vm127, %v64, %v55
    %vm129 = vcmask 1042434
    %v130 = vsel %vm129, %v73, %v128
    %vm131 = vcmask 1043459
    %v132 = vsel %vm131, %v82, %v130
    %vm133 = vcmask 1044484
    %v134 = vsel %vm133, %v91, %v132
    %vm135 = vcmask 1045509
    %v136 = vsel %vm135, %v100, %v134
    %vm137 = vcmask 1046534
    %v138 = vsel %vm137, %v109, %v136
    %vm139 = vcmask 1047559
    %v140 = vsel %vm139, %v118, %v138
    %v142 = vadd.f32 %v29, %v140
    %143 = vst.msk [vmem:[#allocation2] sm:$0xff] %vm46, %v142
    // Predicated region
    $region14: #{tpu_custom_call.1} parent=1 // pred_check
      %p144 = pneg %p23
    $region15: #{tpu_custom_call.1} parent=1 // pred_check_branch
      %146 = sbr.rel (%p144) target = $region17
    $region16: #{tpu_custom_call.1} parent=1 // pred_region
      %v147 = vld [vmem:[#allocation2] sm:$0xff]
      %v148 = vmul.f32 %v147, 0.0625
      %v149 = vxor.u32 %v148, 2147483648
      %v150 = vmul.f32 %v149, 1.442695
      %v151 = vpow.pop %v150
      %v152 = vadd.f32 %v151, 1.0
      %v153 = vrcp.pop %v152
      %v154 = vmul.f32 1.0, %v153
      %155 = vst.msk [vmem:[#allocation6] sm:$0xff] %vm46, %v154
    $region17: #{tpu_custom_call.1} parent=1 // pred_fallthru
      _
    // Predicated region
    $region18: #{tpu_custom_call.1} parent=1 // pred_check
      _
    $region19: #{tpu_custom_call.1} parent=1 // pred_check_branch
      %157 = sbr.rel (0) target = $region21
    $region20: #{tpu_custom_call.1} parent=1 // pred_region
      %s159 = ssub.s32 128, 128
      %160 = vsyncadd [#allocation5], %s159
      %s162 = sshll.u32 [#allocation6], 4
      %s163 = int_to_ptr.vmem [resolvable:$true] %s162
      %165 = dma.vmem_to_hbm [thread:$0]  %s163, 128, %s1, [#allocation5]
    $region21: #{tpu_custom_call.1} parent=1 // pred_fallthru
      _
    // Predicated region
    $region22: #{tpu_custom_call.1} parent=1 // pred_check
      _
    $region23: #{tpu_custom_call.1} parent=1 // pred_check_branch
      %167 = sbr.rel (0) target = $region25
    $region24: #{tpu_custom_call.1} parent=1 // pred_region
      %168 = dma.done [#allocation5], 128
    $region25: #{tpu_custom_call.1} parent=1 // pred_fallthru
      _
    %169 = vsyncpa [#allocation4], 1
    %170 = vsyncpa [#allocation5], 1

</llo_original>
